<compile_context>
chip_gen: v6e
topology: v6e:2x2x1
jax: 0.10.0
libtpu: 0.0.40
codegen_flags: <defaults>
</compile_context>

<pallas_src>
import collections
import functools

import jax
import jax.numpy as jnp
from jax import lax
from jax.experimental import pallas as pl
from jax.experimental.pallas import tpu as pltpu

_LANE = 128
_SUBLANE = 8


def _round_up(n, m):
    return ((n + m - 1) // m) * m


def _vmem_capacity_bytes():
    """Physical VMEM per TensorCore (128 MiB v5e/v6e, 64 MiB v7x)."""
    try:
        cap = int(pltpu.get_tpu_info().vmem_capacity_bytes)
        if cap > 0:
            return cap
    except Exception:
        pass
    return 64 * 1024 * 1024  # conservative fallback (v7x-sized)


# ---------------------------------------------------------------------------
# Kernels
# ---------------------------------------------------------------------------
def _residual_layernorm(z, x_f32, g, beta, eps, d_feat):
    """z = W2-output (+b2), f32.  Adds residual, LayerNorms over features.

    Padded feature lanes of z / x are exact zeros, so sums divided by the TRUE
    feature count give the correct mean; padded lanes are masked for the
    centered term so the variance is exact as well.
    """
    z = z + x_f32
    d_pad = z.shape[-1]
    inv_d = 1.0 / d_feat
    mean = jnp.sum(z, axis=-1, keepdims=True) * inv_d
    c = z - mean
    if d_pad != d_feat:
        lane = lax.broadcasted_iota(jnp.int32, (1, d_pad), 1)
        c = jnp.where(lane < d_feat, c, 0.0)
    var = jnp.sum(c * c, axis=-1, keepdims=True) * inv_d
    norm = c * lax.rsqrt(var + eps)
    return norm * g + beta


def _ffn_fused_kernel(x_ref, w1t_ref, b1_ref, w2t_ref, b2_ref, g_ref, beta_ref,
                      o_ref, *, eps, d_feat):
    """Full FFN for one row tile; full weight slabs resident in VMEM."""
    x = x_ref[...]

    # Both MXU operands in the weight dtype (native bf16 path on v6e/v7x),
    # f32 accumulation via preferred_element_type.
    h = jnp.dot(x.astype(w1t_ref.dtype), w1t_ref[...],
                preferred_element_type=jnp.float32)
    h = jnp.maximum(h + b1_ref[...], 0.0)

    y = jnp.dot(h.astype(w2t_ref.dtype), w2t_ref[...],
                preferred_element_type=jnp.float32)
    z = y + b2_ref[...]

    # dropout: identity at inference time.
    # TODO(synk): training-mode dropout (pltpu.prng_* Bernoulli mask) not emitted.

    out = _residual_layernorm(z, x.astype(jnp.float32),
                              g_ref[...], beta_ref[...], eps, d_feat)
    o_ref[...] = out.astype(o_ref.dtype)


def _ffn_ksplit_kernel(x_ref, w1t_ref, b1_ref, w2t_ref, b2_ref, g_ref, beta_ref,
                       o_ref, acc_ref, *, eps, d_feat):
    """d_hid-split path: W1^T columns / W2^T rows tiled by tile_k, f32 VMEM
    accumulator across the k grid axis (ReLU + b1 are per hidden column, so
    the split is exact)."""
    k = pl.program_id(1)

    @pl.when(k == 0)
    def _():
        acc_ref[...] = jnp.zeros_like(acc_ref)

    x = x_ref[...]
    h = jnp.dot(x.astype(w1t_ref.dtype), w1t_ref[...],
                preferred_element_type=jnp.float32)
    h = jnp.maximum(h + b1_ref[...], 0.0)
    acc_ref[...] += jnp.dot(h.astype(w2t_ref.dtype), w2t_ref[...],
                            preferred_element_type=jnp.float32)

    @pl.when(k == pl.num_programs(1) - 1)
    def _():
        z = acc_ref[...] + b2_ref[...]
        out = _residual_layernorm(z, x.astype(jnp.float32),
                                  g_ref[...], beta_ref[...], eps, d_feat)
        o_ref[...] = out.astype(o_ref.dtype)


# ---------------------------------------------------------------------------
# Parameter preparation (hoisted out of the per-call hot path)
# ---------------------------------------------------------------------------
FFNParams = collections.namedtuple(
    "FFNParams",
    ["w1t", "b1", "w2t", "b2", "gamma", "beta", "d_in", "d_hid",
     "d_in_p", "d_hid_p"])


def prepare_ffn_params(w1, b1, w2, b2, gamma, beta, *, param_dtype=None):
    """Transpose / zero-pad / cast the weights ONCE per parameter set.

    w1: (d_hid, d_in)   w2: (d_in, d_hid)   gamma/beta/b2: (d_in,)  b1: (d_hid,)
    param_dtype controls only the big matmul slabs (bf16 recommended on
    v6e/v7x); bias / LayerNorm vectors stay f32.
    """
    d_hid, d_in = w1.shape
    if param_dtype is None:
        param_dtype = w1.dtype
    param_dtype = jnp.dtype(param_dtype)

    d_in_p = _round_up(d_in, _LANE)
    d_hid_p = _round_up(d_hid, _LANE)

    w1t = jnp.pad(w1.T.astype(param_dtype),
                  ((0, d_in_p - d_in), (0, d_hid_p - d_hid)))      # (d_in_p, d_hid_p)
    w2t = jnp.pad(w2.T.astype(param_dtype),
                  ((0, d_hid_p - d_hid), (0, d_in_p - d_in)))      # (d_hid_p, d_in_p)
    b1p = jnp.pad(b1.astype(jnp.float32), (0, d_hid_p - d_hid)).reshape(1, d_hid_p)
    b2p = jnp.pad(b2.astype(jnp.float32), (0, d_in_p - d_in)).reshape(1, d_in_p)
    gp = jnp.pad(gamma.astype(jnp.float32), (0, d_in_p - d_in)).reshape(1, d_in_p)
    bp = jnp.pad(beta.astype(jnp.float32), (0, d_in_p - d_in)).reshape(1, d_in_p)
    return FFNParams(w1t, b1p, w2t, b2p, gp, bp, d_in, d_hid, d_in_p, d_hid_p)


# ---------------------------------------------------------------------------
# Wrapper
# ---------------------------------------------------------------------------
def positionwise_feed_forward(x, params, *, eps=1e-5, tile_r=512, tile_k=None,
                              force_ksplit=False, vmem_cap_bytes=None):
    """x: (B, S, d_in); params: FFNParams from prepare_ffn_params()."""
    B, S, d_in = x.shape
    assert d_in == params.d_in, "x feature dim does not match prepared params"
    R = B * S
    d_in_p, d_hid_p = params.d_in_p, params.d_hid_p
    p_item = jnp.dtype(params.w1t.dtype).itemsize
    x_item = jnp.dtype(x.dtype).itemsize

    cap = vmem_cap_bytes if vmem_cap_bytes is not None else _vmem_capacity_bytes()
    budget = int(cap * 0.70)  # leave headroom for Mosaic internal scratch

    # ---- row tiling (generation-aware) -----------------------------------
    R8 = _round_up(R, _SUBLANE)
    tile_r0 = _round_up(max(_SUBLANE, min(tile_r, R8)), _SUBLANE)
    # Keep >= 2 row tiles when feasible so v7x's 2 TensorCores both get work
    # (harmless on single-TC v5e/v6e).
    while tile_r0 > 256 and pl.cdiv(R8, tile_r0) < 2:
        tile_r0 = _round_up(tile_r0 // 2, _SUBLANE)

    vec_bytes = (d_hid_p + 3 * d_in_p) * 4            # b1, b2, gamma, beta (f32)
    weight_bytes = 2 * d_in_p * d_hid_p * p_item      # W1^T + W2^T

    def fused_bytes(tr):
        # double-buffered x/out tiles + (single-buffered) resident weights
        # + f32 intermediates (h, z) with margin.
        return (2 * tr * d_in_p * (x_item + x_item)
                + weight_bytes + vec_bytes
                + tr * (d_hid_p + 2 * d_in_p) * 4)

    def ksplit_bytes(tr, tk):
        return (2 * tr * d_in_p * (x_item + x_item)       # x/out tiles
                + tr * d_in_p * 4                          # f32 accumulator
                + 2 * 2 * d_in_p * tk * p_item             # weight chunks (double-buffered)
                + 2 * (tk + 3 * d_in_p) * 4                # bias chunks etc.
                + tr * (tk + d_in_p) * 4)                  # intermediates

    use_ksplit = bool(force_ksplit) or (weight_bytes + vec_bytes > budget // 2)

    if not use_ksplit:
        tile_r = tile_r0
        while tile_r > 64 and fused_bytes(tile_r) > budget:
            tile_r = _round_up(tile_r // 2, _SUBLANE)
        if fused_bytes(tile_r) > budget:
            use_ksplit = True

    if use_ksplit:
        tile_r = tile_r0
        if tile_k is None:
            tile_k = 512
        tile_k = max(_LANE, min(_round_up(tile_k, _LANE), d_hid_p))
        while d_hid_p % tile_k:
            tile_k -= _LANE
        while tile_k > _LANE and ksplit_bytes(tile_r, tile_k) > budget:
            tile_k -= _LANE
            while d_hid_p % tile_k:
                tile_k -= _LANE
        while tile_r > 64 and ksplit_bytes(tile_r, tile_k) > budget:
            tile_r = _round_up(tile_r // 2, _SUBLANE)
        est = ksplit_bytes(tile_r, tile_k)
    else:
        est = fused_bytes(tile_r)

    vmem_limit = int(min(max(int(est * 1.5), 32 * 1024 * 1024), int(cap * 0.8)))

    # ---- row padding only when actually needed ----------------------------
    R_p = _round_up(R, tile_r)
    grid_r = R_p // tile_r
    need_pad = (R_p != R) or (d_in_p != d_in)
    x2d = x.reshape(R, d_in)
    if need_pad:
        # TODO(synk): ragged last row tile could use an in-kernel masked store
        # instead of a wrapper-side zero-pad copy.
        x2d = jnp.pad(x2d, ((0, R_p - R), (0, d_in_p - d_in)))

    out_shape = jax.ShapeDtypeStruct((R_p, d_in_p), x.dtype)
    args = (x2d, params.w1t, params.b1, params.w2t, params.b2,
            params.gamma, params.beta)

    if use_ksplit:
        grid_k = d_hid_p // tile_k
        gs = pltpu.PrefetchScalarGridSpec(
            num_scalar_prefetch=0,
            grid=(grid_r, grid_k),
            in_specs=[
                pl.BlockSpec((tile_r, d_in_p), lambda i, k: (i, 0)),   # x rows
                pl.BlockSpec((d_in_p, tile_k), lambda i, k: (0, k)),   # W1^T cols
                pl.BlockSpec((1, tile_k), lambda i, k: (0, k)),        # b1 chunk
                pl.BlockSpec((tile_k, d_in_p), lambda i, k: (k, 0)),   # W2^T rows
                pl.BlockSpec((1, d_in_p), lambda i, k: (0, 0)),        # b2
                pl.BlockSpec((1, d_in_p), lambda i, k: (0, 0)),        # gamma
                pl.BlockSpec((1, d_in_p), lambda i, k: (0, 0)),        # beta
            ],
            out_specs=pl.BlockSpec((tile_r, d_in_p), lambda i, k: (i, 0)),
            scratch_shapes=[pltpu.VMEM((tile_r, d_in_p), jnp.float32)],
        )
        out2d = pl.pallas_call(
            functools.partial(_ffn_ksplit_kernel, eps=eps, d_feat=d_in),
            out_shape=out_shape,
            grid_spec=gs,
            compiler_params=pltpu.CompilerParams(
                dimension_semantics=("parallel", "arbitrary"),
                vmem_limit_bytes=vmem_limit),
        )(*args)
    else:
        def run(use_buffered):
            def const_spec(shape):
                kwargs = {}
                if use_buffered:
                    # Grid-invariant block: single buffer reclaims VMEM.
                    kwargs["pipeline_mode"] = pl.Buffered(1)
                return pl.BlockSpec(shape, lambda i: (0,) * len(shape), **kwargs)

            gs = pltpu.PrefetchScalarGridSpec(
                num_scalar_prefetch=0,
                grid=(grid_r,),
                in_specs=[
                    pl.BlockSpec((tile_r, d_in_p), lambda i: (i, 0)),  # x rows
                    const_spec((d_in_p, d_hid_p)),                     # W1^T
                    const_spec((1, d_hid_p)),                          # b1
                    const_spec((d_hid_p, d_in_p)),                     # W2^T
                    const_spec((1, d_in_p)),                           # b2
                    const_spec((1, d_in_p)),                           # gamma
                    const_spec((1, d_in_p)),                           # beta
                ],
                out_specs=pl.BlockSpec((tile_r, d_in_p), lambda i: (i, 0)),
            )
            return pl.pallas_call(
                functools.partial(_ffn_fused_kernel, eps=eps, d_feat=d_in),
                out_shape=out_shape,
                grid_spec=gs,
                compiler_params=pltpu.CompilerParams(
                    dimension_semantics=("parallel",),
                    vmem_limit_bytes=vmem_limit),
            )(*args)

        try:
            out2d = run(use_buffered=True)
        except Exception:
            # pipeline_mode=pl.Buffered may be unsupported on some jax
            # versions; fall back to default double-buffering.
            out2d = run(use_buffered=False)

    if need_pad:
        out2d = out2d[:R, :d_in]
    return out2d.reshape(B, S, d_in)


def positionwise_feed_forward_raw(x, w1, b1, w2, b2, gamma, beta,
                                  *, param_dtype=None, **kw):
    """Convenience one-shot wrapper (prep not hoisted — prefer prepare_ffn_params)."""
    params = prepare_ffn_params(w1, b1, w2, b2, gamma, beta,
                                param_dtype=param_dtype)
    return positionwise_feed_forward(x, params, **kw)


# ---------------------------------------------------------------------------
# Pure-JAX reference (mirrors the PyTorch forward in eval mode)
# ---------------------------------------------------------------------------
def _reference(x, w1, b1, w2, b2, gamma, beta, eps=1e-5):
    h = jnp.maximum(jnp.einsum("bsi,hi->bsh", x, w1) + b1, 0.0)
    y = jnp.einsum("bsh,ih->bsi", h, w2) + b2
    z = y + x
    mean = jnp.mean(z, axis=-1, keepdims=True)
    var = jnp.mean((z - mean) ** 2, axis=-1, keepdims=True)
    return (z - mean) / jnp.sqrt(var + eps) * gamma + beta


if __name__ == "__main__":
    B, S, d_in, d_hid = 2, 8, 32, 64

    key = jax.random.PRNGKey(0)
    kx, k1, kb1, k2, kb2 = jax.random.split(key, 5)

    x = jax.random.normal(kx, (B, S, d_in), dtype=jnp.float32)

    # Deterministic synthetic parameters (shapes match nn.Conv1d(k=1) squeezed
    # over the kernel dim, and nn.LayerNorm(d_in)).
    w1 = jax.random.normal(k1, (d_hid, d_in), dtype=jnp.float32) * 0.1
    b1 = jax.random.normal(kb1, (d_hid,), dtype=jnp.float32) * 0.1
    w2 = jax.random.normal(k2, (d_in, d_hid), dtype=jnp.float32) * 0.1
    b2 = jax.random.normal(kb2, (d_in,), dtype=jnp.float32) * 0.1
    gamma = jnp.ones((d_in,), dtype=jnp.float32)
    beta = jnp.zeros((d_in,), dtype=jnp.float32)

    ref = _reference(x, w1, b1, w2, b2, gamma, beta)

    # 1) Fused path, f32 params (matches the reference to tight tolerance).
    params_f32 = prepare_ffn_params(w1, b1, w2, b2, gamma, beta)
    out = jax.block_until_ready(positionwise_feed_forward(x, params_f32))
    assert out.shape == (B, S, d_in)
    assert jnp.allclose(out, ref, atol=1e-4, rtol=1e-4), "f32 fused mismatch"

    # 2) Fused path, bf16 weight slabs (native-MXU mixed precision) — relaxed tol.
    params_bf16 = prepare_ffn_params(w1, b1, w2, b2, gamma, beta,
                                     param_dtype=jnp.bfloat16)
    out_bf16 = jax.block_until_ready(positionwise_feed_forward(x, params_bf16))
    assert jnp.allclose(out_bf16, ref, atol=5e-2, rtol=5e-2), "bf16 fused mismatch"

    # 3) d_hid-split (K-reduction) path forced on a larger hidden dim so the
    #    accumulator loop runs for >1 step.
    d_hid2 = 256
    k3, kb3, k4, kb4 = jax.random.split(jax.random.PRNGKey(1), 4)
    w1b = jax.random.normal(k3, (d_hid2, d_in), dtype=jnp.float32) * 0.1
    b1b = jax.random.normal(kb3, (d_hid2,), dtype=jnp.float32) * 0.1
    w2b = jax.random.normal(k4, (d_in, d_hid2), dtype=jnp.float32) * 0.1
    b2b = jax.random.normal(kb4, (d_in,), dtype=jnp.float32) * 0.1
    ref2 = _reference(x, w1b, b1b, w2b, b2b, gamma, beta)
    params2 = prepare_ffn_params(w1b, b1b, w2b, b2b, gamma, beta)
    out2 = jax.block_until_ready(
        positionwise_feed_forward(x, params2, force_ksplit=True, tile_k=128))
    assert jnp.allclose(out2, ref2, atol=1e-4, rtol=1e-4), "k-split mismatch"

    print("KERNEL_OK")
</pallas_src>

<mosaic_0001>
module attributes {stable_mosaic.version = 11 : i64} {
  func.func @_ffn_fused_kernel(%arg0: i32, %arg1: memref<16x128xf32, #tpu.memory_space<vmem>>, %arg2: memref<128x128xf32, #tpu.memory_space<vmem>>, %arg3: memref<1x128xf32, #tpu.memory_space<vmem>>, %arg4: memref<128x128xf32, #tpu.memory_space<vmem>>, %arg5: memref<1x128xf32, #tpu.memory_space<vmem>>, %arg6: memref<1x128xf32, #tpu.memory_space<vmem>>, %arg7: memref<1x128xf32, #tpu.memory_space<vmem>>, %arg8: memref<16x128xf32, #tpu.memory_space<vmem>>) attributes {dimension_semantics = [#tpu.dimension_semantics<parallel>], iteration_bounds = array<i64: 1>, scalar_prefetch = 0 : i64, scratch_operands = 0 : i64, tpu.core_type = #tpu.core_type<tc>, window_params = [{transform_indices = @transform_0, window_bounds = array<i64: 16, 128>}, {pipeline_mode = #tpu.pipeline_mode<synchronous>, transform_indices = @transform_1, window_bounds = array<i64: 128, 128>}, {pipeline_mode = #tpu.pipeline_mode<synchronous>, transform_indices = @transform_2, window_bounds = array<i64: 1, 128>}, {pipeline_mode = #tpu.pipeline_mode<synchronous>, transform_indices = @transform_3, window_bounds = array<i64: 128, 128>}, {pipeline_mode = #tpu.pipeline_mode<synchronous>, transform_indices = @transform_4, window_bounds = array<i64: 1, 128>}, {pipeline_mode = #tpu.pipeline_mode<synchronous>, transform_indices = @transform_5, window_bounds = array<i64: 1, 128>}, {pipeline_mode = #tpu.pipeline_mode<synchronous>, transform_indices = @transform_6, window_bounds = array<i64: 1, 128>}, {transform_indices = @transform_7, window_bounds = array<i64: 16, 128>}]} {
    %c0 = arith.constant 0 : index
    %c0_0 = arith.constant 0 : index
    %0 = vector.load %arg1[%c0, %c0_0] : memref<16x128xf32, #tpu.memory_space<vmem>>, vector<16x128xf32>
    %c0_1 = arith.constant 0 : index
    %c0_2 = arith.constant 0 : index
    %1 = vector.load %arg2[%c0_1, %c0_2] : memref<128x128xf32, #tpu.memory_space<vmem>>, vector<128x128xf32>
    %cst = arith.constant dense<0.000000e+00> : vector<16x128xf32>
    %2 = tpu.matmul %0, %1, %cst {dimension_numbers = #tpu.dot_dimension_numbers<[1], [0], [0], [1], [0, 0, 1, 1], [], []>} : vector<16x128xf32>, vector<128x128xf32>, vector<16x128xf32> -> vector<16x128xf32>
    %c0_3 = arith.constant 0 : index
    %c0_4 = arith.constant 0 : index
    %3 = vector.load %arg3[%c0_3, %c0_4] : memref<1x128xf32, #tpu.memory_space<vmem>>, vector<1x128xf32>
    %4 = vector.broadcast %3 : vector<1x128xf32> to vector<16x128xf32>
    %5 = arith.addf %2, %4 : vector<16x128xf32>
    %cst_5 = arith.constant 0.000000e+00 : f32
    %6 = vector.broadcast %cst_5 : f32 to vector<16x128xf32>
    %7 = arith.maximumf %5, %6 : vector<16x128xf32>
    %c0_6 = arith.constant 0 : index
    %c0_7 = arith.constant 0 : index
    %8 = vector.load %arg4[%c0_6, %c0_7] : memref<128x128xf32, #tpu.memory_space<vmem>>, vector<128x128xf32>
    %cst_8 = arith.constant dense<0.000000e+00> : vector<16x128xf32>
    %9 = tpu.matmul %7, %8, %cst_8 {dimension_numbers = #tpu.dot_dimension_numbers<[1], [0], [0], [1], [0, 0, 1, 1], [], []>} : vector<16x128xf32>, vector<128x128xf32>, vector<16x128xf32> -> vector<16x128xf32>
    %c0_9 = arith.constant 0 : index
    %c0_10 = arith.constant 0 : index
    %10 = vector.load %arg5[%c0_9, %c0_10] : memref<1x128xf32, #tpu.memory_space<vmem>>, vector<1x128xf32>
    %11 = vector.broadcast %10 : vector<1x128xf32> to vector<16x128xf32>
    %12 = arith.addf %9, %11 : vector<16x128xf32>
    %c0_11 = arith.constant 0 : index
    %c0_12 = arith.constant 0 : index
    %13 = vector.load %arg6[%c0_11, %c0_12] : memref<1x128xf32, #tpu.memory_space<vmem>>, vector<1x128xf32>
    %c0_13 = arith.constant 0 : index
    %c0_14 = arith.constant 0 : index
    %14 = vector.load %arg7[%c0_13, %c0_14] : memref<1x128xf32, #tpu.memory_space<vmem>>, vector<1x128xf32>
    %15 = arith.addf %12, %0 : vector<16x128xf32>
    %cst_15 = arith.constant dense<0.000000e+00> : vector<16xf32>
    %16 = vector.multi_reduction <add>, %15, %cst_15 [1] : vector<16x128xf32> to vector<16xf32>
    %17 = vector.shape_cast %16 : vector<16xf32> to vector<16x1xf32>
    %cst_16 = arith.constant 3.125000e-02 : f32
    %18 = vector.broadcast %cst_16 : f32 to vector<16x1xf32>
    %19 = arith.mulf %17, %18 : vector<16x1xf32>
    %20 = vector.broadcast %19 : vector<16x1xf32> to vector<16x128xf32>
    %21 = arith.subf %15, %20 : vector<16x128xf32>
    %22 = tpu.iota {dimensions = array<i32: 1>} : vector<1x128xi32>
    %c32_i32 = arith.constant 32 : i32
    %23 = vector.broadcast %c32_i32 : i32 to vector<1x128xi32>
    %24 = arith.cmpi slt, %22, %23 : vector<1x128xi32>
    %cst_17 = arith.constant 0.000000e+00 : f32
    %25 = vector.shape_cast %24 : vector<1x128xi1> to vector<1x128xi1>
    %26 = vector.broadcast %25 : vector<1x128xi1> to vector<16x128xi1>
    %27 = vector.broadcast %cst_17 : f32 to vector<16x128xf32>
    %28 = arith.select %26, %21, %27 : vector<16x128xi1>, vector<16x128xf32>
    %29 = arith.mulf %28, %28 : vector<16x128xf32>
    %cst_18 = arith.constant dense<0.000000e+00> : vector<16xf32>
    %30 = vector.multi_reduction <add>, %29, %cst_18 [1] : vector<16x128xf32> to vector<16xf32>
    %31 = vector.shape_cast %30 : vector<16xf32> to vector<16x1xf32>
    %cst_19 = arith.constant 3.125000e-02 : f32
    %32 = vector.broadcast %cst_19 : f32 to vector<16x1xf32>
    %33 = arith.mulf %31, %32 : vector<16x1xf32>
    %cst_20 = arith.constant 9.99999974E-6 : f32
    %34 = vector.broadcast %cst_20 : f32 to vector<16x1xf32>
    %35 = arith.addf %33, %34 : vector<16x1xf32>
    %36 = math.rsqrt %35 : vector<16x1xf32>
    %37 = vector.broadcast %36 : vector<16x1xf32> to vector<16x128xf32>
    %38 = arith.mulf %28, %37 : vector<16x128xf32>
    %39 = vector.broadcast %13 : vector<1x128xf32> to vector<16x128xf32>
    %40 = arith.mulf %38, %39 : vector<16x128xf32>
    %41 = vector.broadcast %14 : vector<1x128xf32> to vector<16x128xf32>
    %42 = arith.addf %40, %41 : vector<16x128xf32>
    %c0_21 = arith.constant 0 : index
    %c0_22 = arith.constant 0 : index
    %43 = vector.load %arg8[%c0_21, %c0_22] : memref<16x128xf32, #tpu.memory_space<vmem>>, vector<16x128xf32>
    tpu.vector_store %arg8[%c0_21, %c0_22], %42 {strides = array<i32>} : memref<16x128xf32, #tpu.memory_space<vmem>>, vector<16x128xf32>,
    return
  }
  func.func @transform_0(%arg0: i32) -> (i32, i32) {
    %c0_i32 = arith.constant 0 : i32
    %c0_i32_0 = arith.constant 0 : i32
    return %arg0, %c0_i32 : i32, i32
  }
  func.func @transform_1(%arg0: i32) -> (i32, i32) {
    %c0_i32 = arith.constant 0 : i32
    %c0_i32_0 = arith.constant 0 : i32
    %c0_i32_1 = arith.constant 0 : i32
    return %c0_i32, %c0_i32_0 : i32, i32
  }
  func.func @transform_2(%arg0: i32) -> (i32, i32) {
    %c0_i32 = arith.constant 0 : i32
    %c0_i32_0 = arith.constant 0 : i32
    %c0_i32_1 = arith.constant 0 : i32
    return %c0_i32, %c0_i32_0 : i32, i32
  }
  func.func @transform_3(%arg0: i32) -> (i32, i32) {
    %c0_i32 = arith.constant 0 : i32
    %c0_i32_0 = arith.constant 0 : i32
    %c0_i32_1 = arith.constant 0 : i32
    return %c0_i32, %c0_i32_0 : i32, i32
  }
  func.func @transform_4(%arg0: i32) -> (i32, i32) {
    %c0_i32 = arith.constant 0 : i32
    %c0_i32_0 = arith.constant 0 : i32
    %c0_i32_1 = arith.constant 0 : i32
    return %c0_i32, %c0_i32_0 : i32, i32
  }
  func.func @transform_5(%arg0: i32) -> (i32, i32) {
    %c0_i32 = arith.constant 0 : i32
    %c0_i32_0 = arith.constant 0 : i32
    %c0_i32_1 = arith.constant 0 : i32
    return %c0_i32, %c0_i32_0 : i32, i32
  }
  func.func @transform_6(%arg0: i32) -> (i32, i32) {
    %c0_i32 = arith.constant 0 : i32
    %c0_i32_0 = arith.constant 0 : i32
    %c0_i32_1 = arith.constant 0 : i32
    return %c0_i32, %c0_i32_0 : i32, i32
  }
  func.func @transform_7(%arg0: i32) -> (i32, i32) {
    %c0_i32 = arith.constant 0 : i32
    %c0_i32_0 = arith.constant 0 : i32
    return %arg0, %c0_i32 : i32, i32
  }
}

module attributes {stable_mosaic.version = 11 : i64} {
  func.func @_ffn_fused_kernel(%arg0: i32, %arg1: memref<16x128xf32, #tpu.memory_space<vmem>>, %arg2: memref<128x128xf32, #tpu.memory_space<vmem>>, %arg3: memref<1x128xf32, #tpu.memory_space<vmem>>, %arg4: memref<128x128xf32, #tpu.memory_space<vmem>>, %arg5: memref<1x128xf32, #tpu.memory_space<vmem>>, %arg6: memref<1x128xf32, #tpu.memory_space<vmem>>, %arg7: memref<1x128xf32, #tpu.memory_space<vmem>>, %arg8: memref<16x128xf32, #tpu.memory_space<vmem>>) attributes {dimension_semantics = [#tpu.dimension_semantics<parallel>], iteration_bounds = array<i64: 1>, scalar_prefetch = 0 : i64, scratch_operands = 0 : i64, tpu.core_type = #tpu.core_type<tc>, window_params = [{transform_indices = @transform_0, window_bounds = array<i64: 16, 128>}, {pipeline_mode = #tpu.pipeline_mode<synchronous>, transform_indices = @transform_1, window_bounds = array<i64: 128, 128>}, {pipeline_mode = #tpu.pipeline_mode<synchronous>, transform_indices = @transform_2, window_bounds = array<i64: 1, 128>}, {pipeline_mode = #tpu.pipeline_mode<synchronous>, transform_indices = @transform_3, window_bounds = array<i64: 128, 128>}, {pipeline_mode = #tpu.pipeline_mode<synchronous>, transform_indices = @transform_4, window_bounds = array<i64: 1, 128>}, {pipeline_mode = #tpu.pipeline_mode<synchronous>, transform_indices = @transform_5, window_bounds = array<i64: 1, 128>}, {pipeline_mode = #tpu.pipeline_mode<synchronous>, transform_indices = @transform_6, window_bounds = array<i64: 1, 128>}, {transform_indices = @transform_7, window_bounds = array<i64: 16, 128>}]} {
    %c0 = arith.constant 0 : index
    %c0_0 = arith.constant 0 : index
    %0 = vector.load %arg1[%c0, %c0_0] : memref<16x128xf32, #tpu.memory_space<vmem>>, vector<16x128xf32>
    %c0_1 = arith.constant 0 : index
    %c0_2 = arith.constant 0 : index
    %1 = vector.load %arg2[%c0_1, %c0_2] : memref<128x128xf32, #tpu.memory_space<vmem>>, vector<128x128xf32>
    %cst = arith.constant dense<0.000000e+00> : vector<16x128xf32>
    %2 = tpu.matmul %0, %1, %cst {dimension_numbers = #tpu.dot_dimension_numbers<[1], [0], [0], [1], [0, 0, 1, 1], [], []>} : vector<16x128xf32>, vector<128x128xf32>, vector<16x128xf32> -> vector<16x128xf32>
    %c0_3 = arith.constant 0 : index
    %c0_4 = arith.constant 0 : index
    %3 = vector.load %arg3[%c0_3, %c0_4] : memref<1x128xf32, #tpu.memory_space<vmem>>, vector<1x128xf32>
    %4 = vector.broadcast %3 : vector<1x128xf32> to vector<16x128xf32>
    %5 = arith.addf %2, %4 : vector<16x128xf32>
    %cst_5 = arith.constant 0.000000e+00 : f32
    %6 = vector.broadcast %cst_5 : f32 to vector<16x128xf32>
    %7 = arith.maximumf %5, %6 : vector<16x128xf32>
    %c0_6 = arith.constant 0 : index
    %c0_7 = arith.constant 0 : index
    %8 = vector.load %arg4[%c0_6, %c0_7] : memref<128x128xf32, #tpu.memory_space<vmem>>, vector<128x128xf32>
    %cst_8 = arith.constant dense<0.000000e+00> : vector<16x128xf32>
    %9 = tpu.matmul %7, %8, %cst_8 {dimension_numbers = #tpu.dot_dimension_numbers<[1], [0], [0], [1], [0, 0, 1, 1], [], []>} : vector<16x128xf32>, vector<128x128xf32>, vector<16x128xf32> -> vector<16x128xf32>
    %c0_9 = arith.constant 0 : index
    %c0_10 = arith.constant 0 : index
    %10 = vector.load %arg5[%c0_9, %c0_10] : memref<1x128xf32, #tpu.memory_space<vmem>>, vector<1x128xf32>
    %11 = vector.broadcast %10 : vector<1x128xf32> to vector<16x128xf32>
    %12 = arith.addf %9, %11 : vector<16x128xf32>
    %c0_11 = arith.constant 0 : index
    %c0_12 = arith.constant 0 : index
    %13 = vector.load %arg6[%c0_11, %c0_12] : memref<1x128xf32, #tpu.memory_space<vmem>>, vector<1x128xf32>
    %c0_13 = arith.constant 0 : index
    %c0_14 = arith.constant 0 : index
    %14 = vector.load %arg7[%c0_13, %c0_14] : memref<1x128xf32, #tpu.memory_space<vmem>>, vector<1x128xf32>
    %15 = arith.addf %12, %0 : vector<16x128xf32>
    %cst_15 = arith.constant dense<0.000000e+00> : vector<16xf32>
    %16 = vector.multi_reduction <add>, %15, %cst_15 [1] : vector<16x128xf32> to vector<16xf32>
    %17 = vector.shape_cast %16 : vector<16xf32> to vector<16x1xf32>
    %cst_16 = arith.constant 3.125000e-02 : f32
    %18 = vector.broadcast %cst_16 : f32 to vector<16x1xf32>
    %19 = arith.mulf %17, %18 : vector<16x1xf32>
    %20 = vector.broadcast %19 : vector<16x1xf32> to vector<16x128xf32>
    %21 = arith.subf %15, %20 : vector<16x128xf32>
    %22 = tpu.iota {dimensions = array<i32: 1>} : vector<1x128xi32>
    %c32_i32 = arith.constant 32 : i32
    %23 = vector.broadcast %c32_i32 : i32 to vector<1x128xi32>
    %24 = arith.cmpi slt, %22, %23 : vector<1x128xi32>
    %cst_17 = arith.constant 0.000000e+00 : f32
    %25 = vector.shape_cast %24 : vector<1x128xi1> to vector<1x128xi1>
    %26 = vector.broadcast %25 : vector<1x128xi1> to vector<16x128xi1>
    %27 = vector.broadcast %cst_17 : f32 to vector<16x128xf32>
    %28 = arith.select %26, %21, %27 : vector<16x128xi1>, vector<16x128xf32>
    %29 = arith.mulf %28, %28 : vector<16x128xf32>
    %cst_18 = arith.constant dense<0.000000e+00> : vector<16xf32>
    %30 = vector.multi_reduction <add>, %29, %cst_18 [1] : vector<16x128xf32> to vector<16xf32>
    %31 = vector.shape_cast %30 : vector<16xf32> to vector<16x1xf32>
    %cst_19 = arith.constant 3.125000e-02 : f32
    %32 = vector.broadcast %cst_19 : f32 to vector<16x1xf32>
    %33 = arith.mulf %31, %32 : vector<16x1xf32>
    %cst_20 = arith.constant 9.99999974E-6 : f32
    %34 = vector.broadcast %cst_20 : f32 to vector<16x1xf32>
    %35 = arith.addf %33, %34 : vector<16x1xf32>
    %36 = math.rsqrt %35 : vector<16x1xf32>
    %37 = vector.broadcast %36 : vector<16x1xf32> to vector<16x128xf32>
    %38 = arith.mulf %28, %37 : vector<16x128xf32>
    %39 = vector.broadcast %13 : vector<1x128xf32> to vector<16x128xf32>
    %40 = arith.mulf %38, %39 : vector<16x128xf32>
    %41 = vector.broadcast %14 : vector<1x128xf32> to vector<16x128xf32>
    %42 = arith.addf %40, %41 : vector<16x128xf32>
    %c0_21 = arith.constant 0 : index
    %c0_22 = arith.constant 0 : index
    %43 = vector.load %arg8[%c0_21, %c0_22] : memref<16x128xf32, #tpu.memory_space<vmem>>, vector<16x128xf32>
    tpu.vector_store %arg8[%c0_21, %c0_22], %42 {strides = array<i32>} : memref<16x128xf32, #tpu.memory_space<vmem>>, vector<16x128xf32>,
    return
  }
  func.func @transform_0(%arg0: i32) -> (i32, i32) {
    %c0_i32 = arith.constant 0 : i32
    %c0_i32_0 = arith.constant 0 : i32
    return %arg0, %c0_i32 : i32, i32
  }
  func.func @transform_1(%arg0: i32) -> (i32, i32) {
    %c0_i32 = arith.constant 0 : i32
    %c0_i32_0 = arith.constant 0 : i32
    %c0_i32_1 = arith.constant 0 : i32
    return %c0_i32, %c0_i32_0 : i32, i32
  }
  func.func @transform_2(%arg0: i32) -> (i32, i32) {
    %c0_i32 = arith.constant 0 : i32
    %c0_i32_0 = arith.constant 0 : i32
    %c0_i32_1 = arith.constant 0 : i32
    return %c0_i32, %c0_i32_0 : i32, i32
  }
  func.func @transform_3(%arg0: i32) -> (i32, i32) {
    %c0_i32 = arith.constant 0 : i32
    %c0_i32_0 = arith.constant 0 : i32
    %c0_i32_1 = arith.constant 0 : i32
    return %c0_i32, %c0_i32_0 : i32, i32
  }
  func.func @transform_4(%arg0: i32) -> (i32, i32) {
    %c0_i32 = arith.constant 0 : i32
    %c0_i32_0 = arith.constant 0 : i32
    %c0_i32_1 = arith.constant 0 : i32
    return %c0_i32, %c0_i32_0 : i32, i32
  }
  func.func @transform_5(%arg0: i32) -> (i32, i32) {
    %c0_i32 = arith.constant 0 : i32
    %c0_i32_0 = arith.constant 0 : i32
    %c0_i32_1 = arith.constant 0 : i32
    return %c0_i32, %c0_i32_0 : i32, i32
  }
  func.func @transform_6(%arg0: i32) -> (i32, i32) {
    %c0_i32 = arith.constant 0 : i32
    %c0_i32_0 = arith.constant 0 : i32
    %c0_i32_1 = arith.constant 0 : i32
    return %c0_i32, %c0_i32_0 : i32, i32
  }
  func.func @transform_7(%arg0: i32) -> (i32, i32) {
    %c0_i32 = arith.constant 0 : i32
    %c0_i32_0 = arith.constant 0 : i32
    return %arg0, %c0_i32 : i32, i32
  }
}

</mosaic_0001>

<llo_original>
// kernel: tpu_custom_call.1
$region0: #{tpu_custom_call.1}
  #allocation0 [shape = 'u32[]', space=smem, size = 0x4, offset = 0x4, fixed_abs, tag = 'smem constant byte address 0x4 - core index']
  #allocation1 [shape = 'u32[144,128]{1,0:T(1,128)}', space=vmem, size = 0x12000, scoped, tag = 'internal scratch']
  %s0 = inlined_call_operand.hbm [shape: f32[16,128], index: 0, kind: input, shape index: {}]
  %s1 = inlined_call_operand.hbm [shape: f32[128,128], index: 1, kind: input, shape index: {}]
  %s2 = inlined_call_operand.vmem [shape: f32[1,128], index: 2, kind: input, shape index: {}]
  %s3 = inlined_call_operand.hbm [shape: f32[128,128], index: 3, kind: input, shape index: {}]
  %s4 = inlined_call_operand.vmem [shape: f32[1,128], index: 4, kind: input, shape index: {}]
  %s5 = inlined_call_operand.vmem [shape: f32[1,128], index: 5, kind: input, shape index: {}]
  %s6 = inlined_call_operand.vmem [shape: f32[1,128], index: 6, kind: input, shape index: {}]
  %s7 = inlined_call_operand.hbm [shape: f32[16,128], index: 7, kind: output, shape index: {}]
  %s8 = sld [smem:[#allocation0]]
  $region50: #{tpu_custom_call.1} parent=0
    _
  %s10 = ssub.s32 1, %s8
  %s11 = scalar_select 0, %s10, %s8
  $region1: #{tpu_custom_call.1} parent=0
    #allocation2 [shape = 'u8[8192]{0}', space=vmem, size = 0x2000, scoped, tag = 'input window, operand 0, single buffered']
    #allocation3 [shape = 's32[1]{0}', space=sflag, size = 0x4, scoped, tag = 'scoped memory for tpu_custom_call.1']
    #allocation4 [shape = 's32[1]{0}', space=sflag, size = 0x4, scoped, tag = 'scoped memory for tpu_custom_call.1']
    #allocation5 [shape = 'u8[65536]{0}', space=vmem, size = 0x10000, scoped, tag = 'input window, operand 1, single buffered']
    #allocation6 [shape = 's32[1]{0}', space=sflag, size = 0x4, scoped, tag = 'scoped memory for tpu_custom_call.1']
    #allocation7 [shape = 'u8[65536]{0}', space=vmem, size = 0x10000, scoped, tag = 'input window, operand 3, single buffered']
    #allocation8 [shape = 'u8[8192]{0}', space=vmem, size = 0x2000, scoped, tag = 'output window, operand 0, single buffered']
    %12 = vsyncpa [#allocation3], 0
    %13 = vsyncpa [#allocation6], 0
    %14 = vsyncpa [#allocation4], 0
    // Predicated region
    $region2: #{tpu_custom_call.1} parent=1 // pred_check
      _
    $region3: #{tpu_custom_call.1} parent=1 // pred_check_branch
      %16 = sbr.rel (0) target = $region5
    $region4: #{tpu_custom_call.1} parent=1 // pred_region
      %s18 = ssub.s32 256, 256
      %19 = vsyncadd [#allocation3], %s18
      %s20 = sshll.u32 [#allocation2], 4
      %s21 = int_to_ptr.vmem [resolvable:$true] %s20
      %26 = dma.hbm_to_vmem [thread:$0]  %s0, 256, %s21, [#allocation3], 128, 128, 8
    $region5: #{tpu_custom_call.1} parent=1 // pred_fallthru
      _
    // Predicated region
    $region6: #{tpu_custom_call.1} parent=1 // pred_check
      _
    $region7: #{tpu_custom_call.1} parent=1 // pred_check_branch
      %28 = sbr.rel (0) target = $region9
    $region8: #{tpu_custom_call.1} parent=1 // pred_region
      %s30 = ssub.s32 2048, 2048
      %31 = vsyncadd [#allocation6], %s30
      %s32 = sshll.u32 [#allocation5], 4
      %s33 = int_to_ptr.vmem [resolvable:$true] %s32
      %38 = dma.hbm_to_vmem [thread:$0]  %s1, 2048, %s33, [#allocation6], 128, 128, 8
    $region9: #{tpu_custom_call.1} parent=1 // pred_fallthru
      _
    // Predicated region
    $region10: #{tpu_custom_call.1} parent=1 // pred_check
      _
    $region11: #{tpu_custom_call.1} parent=1 // pred_check_branch
      %40 = sbr.rel (0) target = $region13
    $region12: #{tpu_custom_call.1} parent=1 // pred_region
      _
    $region13: #{tpu_custom_call.1} parent=1 // pred_fallthru
      _
    // Predicated region
    $region14: #{tpu_custom_call.1} parent=1 // pred_check
      _
    $region15: #{tpu_custom_call.1} parent=1 // pred_check_branch
      %42 = sbr.rel (0) target = $region17
    $region16: #{tpu_custom_call.1} parent=1 // pred_region
      %s44 = ssub.s32 2048, 2048
      %45 = vsyncadd [#allocation6], %s44
      %s46 = sshll.u32 [#allocation7], 4
      %s47 = int_to_ptr.vmem [resolvable:$true] %s46
      %52 = dma.hbm_to_vmem [thread:$0]  %s3, 2048, %s47, [#allocation6], 128, 128, 8
    $region17: #{tpu_custom_call.1} parent=1 // pred_fallthru
      _
    // Predicated region
    $region18: #{tpu_custom_call.1} parent=1 // pred_check
      _
    $region19: #{tpu_custom_call.1} parent=1 // pred_check_branch
      %54 = sbr.rel (0) target = $region21
    $region20: #{tpu_custom_call.1} parent=1 // pred_region
      _
    $region21: #{tpu_custom_call.1} parent=1 // pred_fallthru
      _
    // Predicated region
    $region22: #{tpu_custom_call.1} parent=1 // pred_check
      _
    $region23: #{tpu_custom_call.1} parent=1 // pred_check_branch
      %56 = sbr.rel (0) target = $region25
    $region24: #{tpu_custom_call.1} parent=1 // pred_region
      _
    $region25: #{tpu_custom_call.1} parent=1 // pred_fallthru
      _
    // Predicated region
    $region26: #{tpu_custom_call.1} parent=1 // pred_check
      _
    $region27: #{tpu_custom_call.1} parent=1 // pred_check_branch
      %58 = sbr.rel (0) target = $region29
    $region28: #{tpu_custom_call.1} parent=1 // pred_region
      _
    $region29: #{tpu_custom_call.1} parent=1 // pred_fallthru
      _
    // Predicated region
    $region30: #{tpu_custom_call.1} parent=1 // pred_check
      _
    $region31: #{tpu_custom_call.1} parent=1 // pred_check_branch
      %60 = sbr.rel (0) target = $region33
    $region32: #{tpu_custom_call.1} parent=1 // pred_region
      %61 = dma.done [#allocation3], 256
    $region33: #{tpu_custom_call.1} parent=1 // pred_fallthru
      _
    // Predicated region
    $region34: #{tpu_custom_call.1} parent=1 // pred_check
      _
    $region35: #{tpu_custom_call.1} parent=1 // pred_check_branch
      %63 = sbr.rel (0) target = $region37
    $region36: #{tpu_custom_call.1} parent=1 // pred_region
      %64 = dma.done [#allocation6], 2048
    $region37: #{tpu_custom_call.1} parent=1 // pred_fallthru
      _
    // Predicated region
    $region38: #{tpu_custom_call.1} parent=1 // pred_check
      _
    $region39: #{tpu_custom_call.1} parent=1 // pred_check_branch
      %66 = sbr.rel (0) target = $region41
    $region40: #{tpu_custom_call.1} parent=1 // pred_region
      %67 = dma.done [#allocation6], 2048
    $region41: #{tpu_custom_call.1} parent=1 // pred_fallthru
      _
    %v68 = vld [vmem:[#allocation2] sm:$0xff]
    %v69 = vld [vmem:[#allocation2 + $0x8] sm:$0xff]
    %v70 = vld [vmem:[#allocation5] sm:$0xff]
    %v71 = vld [vmem:[#allocation5 + $0x8] sm:$0xff]
    %v72 = vld [vmem:[#allocation5 + $0x10] sm:$0xff]
    %v73 = vld [vmem:[#allocation5 + $0x18] sm:$0xff]
    %v74 = vld [vmem:[#allocation5 + $0x20] sm:$0xff]
    %v75 = vld [vmem:[#allocation5 + $0x28] sm:$0xff]
    %v76 = vld [vmem:[#allocation5 + $0x30] sm:$0xff]
    %v77 = vld [vmem:[#allocation5 + $0x38] sm:$0xff]
    %v78 = vld [vmem:[#allocation5 + $0x40] sm:$0xff]
    %v79 = vld [vmem:[#allocation5 + $0x48] sm:$0xff]
    %v80 = vld [vmem:[#allocation5 + $0x50] sm:$0xff]
    %v81 = vld [vmem:[#allocation5 + $0x58] sm:$0xff]
    %v82 = vld [vmem:[#allocation5 + $0x60] sm:$0xff]
    %v83 = vld [vmem:[#allocation5 + $0x68] sm:$0xff]
    %v84 = vld [vmem:[#allocation5 + $0x70] sm:$0xff]
    %v85 = vld [vmem:[#allocation5 + $0x78] sm:$0xff]
    %v86 = vld [vmem:[%s2] sm:$0x1]
    %v88 = vlaneseq
    %v89 = vshrl.u32 %v88, 7
    %v90 = vsub.s32 0, %v89
    %v91 = vrot.slane %v86, %v90
    %93 = vmatprep.subr.mxu0 0.0
    %94 = vmatpush1.msra.mxu0 %v85
    %95 = vmatprep.subr.mxu0 0.0
    %96 = vmatpush1.msra.mxu0 %v84
    %97 = vmatprep.subr.mxu0 0.0
    %98 = vmatpush1.msra.mxu0 %v83
    %99 = vmatprep.subr.mxu0 0.0
    %100 = vmatpush1.msra.mxu0 %v82
    %101 = vmatprep.subr.mxu0 0.0
    %102 = vmatpush1.msra.mxu0 %v81
    %103 = vmatprep.subr.mxu0 0.0
    %104 = vmatpush1.msra.mxu0 %v80
    %105 = vmatprep.subr.mxu0 0.0
    %106 = vmatpush1.msra.mxu0 %v79
    %107 = vmatprep.subr.mxu0 0.0
    %108 = vmatpush1.msra.mxu0 %v78
    %109 = vmatprep.subr.mxu0 0.0
    %110 = vmatpush1.msra.mxu0 %v77
    %111 = vmatprep.subr.mxu0 0.0
    %112 = vmatpush1.msra.mxu0 %v76
    %113 = vmatprep.subr.mxu0 0.0
    %114 = vmatpush1.msra.mxu0 %v75
    %115 = vmatprep.subr.mxu0 0.0
    %116 = vmatpush1.msra.mxu0 %v74
    %117 = vmatprep.subr.mxu0 0.0
    %118 = vmatpush1.msra.mxu0 %v73
    %119 = vmatprep.subr.mxu0 0.0
    %120 = vmatpush1.msra.mxu0 %v72
    %121 = vmatprep.subr.mxu0 0.0
    %122 = vmatpush1.msra.mxu0 %v71
    %123 = vmatprep.subr.mxu0 0.0
    %124 = vmatpush1.msra.mxu0 %v70
    %125 = vmatprep.subr.mxu0 0.0
    %126 = vmatpush2.msra.mxu0 0.0
    %127 = vmatprep.subr.mxu0 0.0
    %128 = vmatpush2.msra.mxu0 0.0
    %129 = vmatprep.subr.mxu0 0.0
    %130 = vmatpush2.msra.mxu0 0.0
    %131 = vmatprep.subr.mxu0 0.0
    %132 = vmatpush2.msra.mxu0 0.0
    %133 = vmatprep.subr.mxu0 0.0
    %134 = vmatpush2.msra.mxu0 0.0
    %135 = vmatprep.subr.mxu0 0.0
    %136 = vmatpush2.msra.mxu0 0.0
    %137 = vmatprep.subr.mxu0 0.0
    %138 = vmatpush2.msra.mxu0 0.0
    %139 = vmatprep.subr.mxu0 0.0
    %140 = vmatpush2.msra.mxu0 0.0
    %141 = vmatprep.subr.mxu0 0.0
    %142 = vmatpush2.msra.mxu0 0.0
    %143 = vmatprep.subr.mxu0 0.0
    %144 = vmatpush2.msra.mxu0 0.0
    %145 = vmatprep.subr.mxu0 0.0
    %146 = vmatpush2.msra.mxu0 0.0
    %147 = vmatprep.subr.mxu0 0.0
    %148 = vmatpush2.msra.mxu0 0.0
    %149 = vmatprep.subr.mxu0 0.0
    %150 = vmatpush2.msra.mxu0 0.0
    %151 = vmatprep.subr.mxu0 0.0
    %152 = vmatpush2.msra.mxu0 0.0
    %153 = vmatprep.subr.mxu0 0.0
    %154 = vmatpush2.msra.mxu0 0.0
    %155 = vmatprep.subr.mxu0 0.0
    %156 = vmatpush2.msra.mxu0 0.0
    %157 = vmatprep.mubr.f32.mxu0 0.0
    %158 = vmatmul.mubr.f32.gmra.mxu0 %v68
    %v159 = vpop.f32.mrf.mxu0
    %v160 = vadd.f32 %v91, %v159
    %v161 = vpop.f32.mrf.mxu0
    %162 = vmatprep.mubr.f32.mxu0 0.0
    %163 = vmatmul.mubr.f32.gmra.mxu0 %v69
    %v164 = vpop.f32.mrf.mxu0
    %v165 = vadd.f32 %v91, %v164
    %v166 = vpop.f32.mrf.mxu0
    %167 = vdwg.mxu0
    %v168 = vmax.f32 %v160, 0.0
    %v169 = vmax.f32 %v165, 0.0
    %v170 = vld [vmem:[#allocation7] sm:$0xff]
    %v171 = vld [vmem:[#allocation7 + $0x8] sm:$0xff]
    %v172 = vld [vmem:[#allocation7 + $0x10] sm:$0xff]
    %v173 = vld [vmem:[#allocation7 + $0x18] sm:$0xff]
    %v174 = vld [vmem:[#allocation7 + $0x20] sm:$0xff]
    %v175 = vld [vmem:[#allocation7 + $0x28] sm:$0xff]
    %v176 = vld [vmem:[#allocation7 + $0x30] sm:$0xff]
    %v177 = vld [vmem:[#allocation7 + $0x38] sm:$0xff]
    %v178 = vld [vmem:[#allocation7 + $0x40] sm:$0xff]
    %v179 = vld [vmem:[#allocation7 + $0x48] sm:$0xff]
    %v180 = vld [vmem:[#allocation7 + $0x50] sm:$0xff]
    %v181 = vld [vmem:[#allocation7 + $0x58] sm:$0xff]
    %v182 = vld [vmem:[#allocation7 + $0x60] sm:$0xff]
    %v183 = vld [vmem:[#allocation7 + $0x68] sm:$0xff]
    %v184 = vld [vmem:[#allocation7 + $0x70] sm:$0xff]
    %v185 = vld [vmem:[#allocation7 + $0x78] sm:$0xff]
    %v186 = vld [vmem:[%s4] sm:$0x1]
    %v188 = vlaneseq
    %v189 = vshrl.u32 %v188, 7
    %v190 = vsub.s32 0, %v189
    %v191 = vrot.slane %v186, %v190
    %193 = vmatprep.subr.mxu0 0.0
    %194 = vmatpush1.msra.mxu0 %v185
    %195 = vmatprep.subr.mxu0 0.0
    %196 = vmatpush1.msra.mxu0 %v184
    %197 = vmatprep.subr.mxu0 0.0
    %198 = vmatpush1.msra.mxu0 %v183
    %199 = vmatprep.subr.mxu0 0.0
    %200 = vmatpush1.msra.mxu0 %v182
    %201 = vmatprep.subr.mxu0 0.0
    %202 = vmatpush1.msra.mxu0 %v181
    %203 = vmatprep.subr.mxu0 0.0
    %204 = vmatpush1.msra.mxu0 %v180
    %205 = vmatprep.subr.mxu0 0.0
    %206 = vmatpush1.msra.mxu0 %v179
    %207 = vmatprep.subr.mxu0 0.0
    %208 = vmatpush1.msra.mxu0 %v178
    %209 = vmatprep.subr.mxu0 0.0
    %210 = vmatpush1.msra.mxu0 %v177
    %211 = vmatprep.subr.mxu0 0.0
    %212 = vmatpush1.msra.mxu0 %v176
    %213 = vmatprep.subr.mxu0 0.0
    %214 = vmatpush1.msra.mxu0 %v175
    %215 = vmatprep.subr.mxu0 0.0
    %216 = vmatpush1.msra.mxu0 %v174
    %217 = vmatprep.subr.mxu0 0.0
    %218 = vmatpush1.msra.mxu0 %v173
    %219 = vmatprep.subr.mxu0 0.0
    %220 = vmatpush1.msra.mxu0 %v172
    %221 = vmatprep.subr.mxu0 0.0
    %222 = vmatpush1.msra.mxu0 %v171
    %223 = vmatprep.subr.mxu0 0.0
    %224 = vmatpush1.msra.mxu0 %v170
    %225 = vmatprep.subr.mxu0 0.0
    %226 = vmatpush2.msra.mxu0 0.0
    %227 = vmatprep.subr.mxu0 0.0
    %228 = vmatpush2.msra.mxu0 0.0
    %229 = vmatprep.subr.mxu0 0.0
    %230 = vmatpush2.msra.mxu0 0.0
    %231 = vmatprep.subr.mxu0 0.0
    %232 = vmatpush2.msra.mxu0 0.0
    %233 = vmatprep.subr.mxu0 0.0
    %234 = vmatpush2.msra.mxu0 0.0
    %235 = vmatprep.subr.mxu0 0.0
    %236 = vmatpush2.msra.mxu0 0.0
    %237 = vmatprep.subr.mxu0 0.0
    %238 = vmatpush2.msra.mxu0 0.0
    %239 = vmatprep.subr.mxu0 0.0
    %240 = vmatpush2.msra.mxu0 0.0
    %241 = vmatprep.subr.mxu0 0.0
    %242 = vmatpush2.msra.mxu0 0.0
    %243 = vmatprep.subr.mxu0 0.0
    %244 = vmatpush2.msra.mxu0 0.0
    %245 = vmatprep.subr.mxu0 0.0
    %246 = vmatpush2.msra.mxu0 0.0
    %247 = vmatprep.subr.mxu0 0.0
    %248 = vmatpush2.msra.mxu0 0.0
    %249 = vmatprep.subr.mxu0 0.0
    %250 = vmatpush2.msra.mxu0 0.0
    %251 = vmatprep.subr.mxu0 0.0
    %252 = vmatpush2.msra.mxu0 0.0
    %253 = vmatprep.subr.mxu0 0.0
    %254 = vmatpush2.msra.mxu0 0.0
    %255 = vmatprep.subr.mxu0 0.0
    %256 = vmatpush2.msra.mxu0 0.0
    %257 = vmatprep.mubr.f32.mxu0 0.0
    %258 = vmatmul.mubr.f32.gmra.mxu0 %v168
    %v259 = vpop.f32.mrf.mxu0
    %v260 = vadd.f32 %v191, %v259
    %v261 = vpop.f32.mrf.mxu0
    %262 = vmatprep.mubr.f32.mxu0 0.0
    %263 = vmatmul.mubr.f32.gmra.mxu0 %v169
    %v264 = vpop.f32.mrf.mxu0
    %v265 = vadd.f32 %v191, %v264
    %v266 = vpop.f32.mrf.mxu0
    %267 = vdwg.mxu0
    %v268 = vld [vmem:[%s5] sm:$0x1]
    %v269 = vld [vmem:[%s6] sm:$0x1]
    %v270 = vadd.f32 %v260, %v68
    %v271 = vadd.f32 %v265, %v69
    %272 = vadd.xlane.f32.xlu0 %v270
    %v273 = vpop.xlane.xlu0 %272
    %274 = vadd.xlane.f32.xlu0 %v271
    %v275 = vpop.xlane.xlu0 %274
    %v276 = vmul.f32 %v273, 0.03125
    %v277 = vmul.f32 %v275, 0.03125
    %v278 = vsub.f32 %v270, %v276
    %v279 = vsub.f32 %v271, %v277
    %v280 = vlaneseq
    %v281 = vand.u32 %v280, 127
    %vm282 = vcmp.lt.s32.totalorder %v281, 32
    %v283 = vsel %vm282, 1, 0
    %vm284 = vcmp.eq.s32.totalorder %v283, 1
    %v285 = vsel %vm284, %v278, 0.0
    %v286 = vsel %vm284, %v279, 0.0
    %v287 = vmul.f32 %v285, %v285
    %v288 = vmul.f32 %v286, %v286
    %289 = vadd.xlane.f32.xlu0 %v287
    %v290 = vpop.xlane.xlu0 %289
    %291 = vadd.xlane.f32.xlu0 %v288
    %v292 = vpop.xlane.xlu0 %291
    %v293 = vmul.f32 %v290, 0.03125
    %v294 = vmul.f32 %v292, 0.03125
    %v295 = vadd.f32 %v293, 1e-05
    %v296 = vadd.f32 %v294, 1e-05
    %v297 = vrsqrt.pop %v295
    %v298 = vrsqrt.pop %v296
    %v299 = vmul.f32 %v285, %v297
    %v300 = vmul.f32 %v286, %v298
    %v302 = vlaneseq
    %v303 = vshrl.u32 %v302, 7
    %v304 = vsub.s32 0, %v303
    %v305 = vrot.slane %v268, %v304
    %v307 = vmul.f32 %v299, %v305
    %v308 = vmul.f32 %v300, %v305
    %v310 = vlaneseq
    %v311 = vshrl.u32 %v310, 7
    %v312 = vsub.s32 0, %v311
    %v313 = vrot.slane %v269, %v312
    %v315 = vadd.f32 %v307, %v313
    %v316 = vadd.f32 %v308, %v313
    %317 = vst [vmem:[#allocation8] sm:$0xff] %v315
    %318 = vst [vmem:[#allocation8 + $0x8] sm:$0xff] %v316
    // Predicated region
    $region42: #{tpu_custom_call.1} parent=1 // pred_check
      _
    $region43: #{tpu_custom_call.1} parent=1 // pred_check_branch
      %320 = sbr.rel (0) target = $region45
    $region44: #{tpu_custom_call.1} parent=1 // pred_region
      %s322 = ssub.s32 256, 256
      %323 = vsyncadd [#allocation4], %s322
      %s324 = sshll.u32 [#allocation8], 4
      %s325 = int_to_ptr.vmem [resolvable:$true] %s324
      %330 = dma.vmem_to_hbm [thread:$0]  %s325, 256, %s7, [#allocation4], 128, 128, 8
    $region45: #{tpu_custom_call.1} parent=1 // pred_fallthru
      _
    // Predicated region
    $region46: #{tpu_custom_call.1} parent=1 // pred_check
      _
    $region47: #{tpu_custom_call.1} parent=1 // pred_check_branch
      %332 = sbr.rel (0) target = $region49
    $region48: #{tpu_custom_call.1} parent=1 // pred_region
      %333 = dma.done [#allocation4], 256
    $region49: #{tpu_custom_call.1} parent=1 // pred_fallthru
      _
    %334 = vsyncpa [#allocation3], 1
    %335 = vsyncpa [#allocation6], 1
    %336 = vsyncpa [#allocation4], 1

// kernel: tpu_custom_call.1
$region0: #{tpu_custom_call.1}
  #allocation0 [shape = 'u32[]', space=smem, size = 0x4, offset = 0x4, fixed_abs, tag = 'smem constant byte address 0x4 - core index']
  #allocation1 [shape = 'u32[144,128]{1,0:T(1,128)}', space=vmem, size = 0x12000, scoped, tag = 'internal scratch']
  %s0 = inlined_call_operand.hbm [shape: f32[16,128], index: 0, kind: input, shape index: {}]
  %s1 = inlined_call_operand.hbm [shape: f32[128,128], index: 1, kind: input, shape index: {}]
  %s2 = inlined_call_operand.vmem [shape: f32[1,128], index: 2, kind: input, shape index: {}]
  %s3 = inlined_call_operand.hbm [shape: f32[128,128], index: 3, kind: input, shape index: {}]
  %s4 = inlined_call_operand.vmem [shape: f32[1,128], index: 4, kind: input, shape index: {}]
  %s5 = inlined_call_operand.vmem [shape: f32[1,128], index: 5, kind: input, shape index: {}]
  %s6 = inlined_call_operand.vmem [shape: f32[1,128], index: 6, kind: input, shape index: {}]
  %s7 = inlined_call_operand.hbm [shape: f32[16,128], index: 7, kind: output, shape index: {}]
  %s8 = sld [smem:[#allocation0]]
  $region50: #{tpu_custom_call.1} parent=0
    _
  %s10 = ssub.s32 1, %s8
  %s11 = scalar_select 0, %s10, %s8
  $region1: #{tpu_custom_call.1} parent=0
    #allocation2 [shape = 'u8[8192]{0}', space=vmem, size = 0x2000, scoped, tag = 'input window, operand 0, single buffered']
    #allocation3 [shape = 's32[1]{0}', space=sflag, size = 0x4, scoped, tag = 'scoped memory for tpu_custom_call.1']
    #allocation4 [shape = 's32[1]{0}', space=sflag, size = 0x4, scoped, tag = 'scoped memory for tpu_custom_call.1']
    #allocation5 [shape = 'u8[65536]{0}', space=vmem, size = 0x10000, scoped, tag = 'input window, operand 1, single buffered']
    #allocation6 [shape = 's32[1]{0}', space=sflag, size = 0x4, scoped, tag = 'scoped memory for tpu_custom_call.1']
    #allocation7 [shape = 'u8[65536]{0}', space=vmem, size = 0x10000, scoped, tag = 'input window, operand 3, single buffered']
    #allocation8 [shape = 'u8[8192]{0}', space=vmem, size = 0x2000, scoped, tag = 'output window, operand 0, single buffered']
    %12 = vsyncpa [#allocation3], 0
    %13 = vsyncpa [#allocation6], 0
    %14 = vsyncpa [#allocation4], 0
    // Predicated region
    $region2: #{tpu_custom_call.1} parent=1 // pred_check
      _
    $region3: #{tpu_custom_call.1} parent=1 // pred_check_branch
      %16 = sbr.rel (0) target = $region5
    $region4: #{tpu_custom_call.1} parent=1 // pred_region
      %s18 = ssub.s32 256, 256
      %19 = vsyncadd [#allocation3], %s18
      %s20 = sshll.u32 [#allocation2], 4
      %s21 = int_to_ptr.vmem [resolvable:$true] %s20
      %26 = dma.hbm_to_vmem [thread:$0]  %s0, 256, %s21, [#allocation3], 128, 128, 8
    $region5: #{tpu_custom_call.1} parent=1 // pred_fallthru
      _
    // Predicated region
    $region6: #{tpu_custom_call.1} parent=1 // pred_check
      _
    $region7: #{tpu_custom_call.1} parent=1 // pred_check_branch
      %28 = sbr.rel (0) target = $region9
    $region8: #{tpu_custom_call.1} parent=1 // pred_region
      %s30 = ssub.s32 2048, 2048
      %31 = vsyncadd [#allocation6], %s30
      %s32 = sshll.u32 [#allocation5], 4
      %s33 = int_to_ptr.vmem [resolvable:$true] %s32
      %38 = dma.hbm_to_vmem [thread:$0]  %s1, 2048, %s33, [#allocation6], 128, 128, 8
    $region9: #{tpu_custom_call.1} parent=1 // pred_fallthru
      _
    // Predicated region
    $region10: #{tpu_custom_call.1} parent=1 // pred_check
      _
    $region11: #{tpu_custom_call.1} parent=1 // pred_check_branch
      %40 = sbr.rel (0) target = $region13
    $region12: #{tpu_custom_call.1} parent=1 // pred_region
      _
    $region13: #{tpu_custom_call.1} parent=1 // pred_fallthru
      _
    // Predicated region
    $region14: #{tpu_custom_call.1} parent=1 // pred_check
      _
    $region15: #{tpu_custom_call.1} parent=1 // pred_check_branch
      %42 = sbr.rel (0) target = $region17
    $region16: #{tpu_custom_call.1} parent=1 // pred_region
      %s44 = ssub.s32 2048, 2048
      %45 = vsyncadd [#allocation6], %s44
      %s46 = sshll.u32 [#allocation7], 4
      %s47 = int_to_ptr.vmem [resolvable:$true] %s46
      %52 = dma.hbm_to_vmem [thread:$0]  %s3, 2048, %s47, [#allocation6], 128, 128, 8
    $region17: #{tpu_custom_call.1} parent=1 // pred_fallthru
      _
    // Predicated region
    $region18: #{tpu_custom_call.1} parent=1 // pred_check
      _
    $region19: #{tpu_custom_call.1} parent=1 // pred_check_branch
      %54 = sbr.rel (0) target = $region21
    $region20: #{tpu_custom_call.1} parent=1 // pred_region
      _
    $region21: #{tpu_custom_call.1} parent=1 // pred_fallthru
      _
    // Predicated region
    $region22: #{tpu_custom_call.1} parent=1 // pred_check
      _
    $region23: #{tpu_custom_call.1} parent=1 // pred_check_branch
      %56 = sbr.rel (0) target = $region25
    $region24: #{tpu_custom_call.1} parent=1 // pred_region
      _
    $region25: #{tpu_custom_call.1} parent=1 // pred_fallthru
      _
    // Predicated region
    $region26: #{tpu_custom_call.1} parent=1 // pred_check
      _
    $region27: #{tpu_custom_call.1} parent=1 // pred_check_branch
      %58 = sbr.rel (0) target = $region29
    $region28: #{tpu_custom_call.1} parent=1 // pred_region
      _
    $region29: #{tpu_custom_call.1} parent=1 // pred_fallthru
      _
    // Predicated region
    $region30: #{tpu_custom_call.1} parent=1 // pred_check
      _
    $region31: #{tpu_custom_call.1} parent=1 // pred_check_branch
      %60 = sbr.rel (0) target = $region33
    $region32: #{tpu_custom_call.1} parent=1 // pred_region
      %61 = dma.done [#allocation3], 256
    $region33: #{tpu_custom_call.1} parent=1 // pred_fallthru
      _
    // Predicated region
    $region34: #{tpu_custom_call.1} parent=1 // pred_check
      _
    $region35: #{tpu_custom_call.1} parent=1 // pred_check_branch
      %63 = sbr.rel (0) target = $region37
    $region36: #{tpu_custom_call.1} parent=1 // pred_region
      %64 = dma.done [#allocation6], 2048
    $region37: #{tpu_custom_call.1} parent=1 // pred_fallthru
      _
    // Predicated region
    $region38: #{tpu_custom_call.1} parent=1 // pred_check
      _
    $region39: #{tpu_custom_call.1} parent=1 // pred_check_branch
      %66 = sbr.rel (0) target = $region41
    $region40: #{tpu_custom_call.1} parent=1 // pred_region
      %67 = dma.done [#allocation6], 2048
    $region41: #{tpu_custom_call.1} parent=1 // pred_fallthru
      _
    %v68 = vld [vmem:[#allocation2] sm:$0xff]
    %v69 = vld [vmem:[#allocation2 + $0x8] sm:$0xff]
    %v70 = vld [vmem:[#allocation5] sm:$0xff]
    %v71 = vld [vmem:[#allocation5 + $0x8] sm:$0xff]
    %v72 = vld [vmem:[#allocation5 + $0x10] sm:$0xff]
    %v73 = vld [vmem:[#allocation5 + $0x18] sm:$0xff]
    %v74 = vld [vmem:[#allocation5 + $0x20] sm:$0xff]
    %v75 = vld [vmem:[#allocation5 + $0x28] sm:$0xff]
    %v76 = vld [vmem:[#allocation5 + $0x30] sm:$0xff]
    %v77 = vld [vmem:[#allocation5 + $0x38] sm:$0xff]
    %v78 = vld [vmem:[#allocation5 + $0x40] sm:$0xff]
    %v79 = vld [vmem:[#allocation5 + $0x48] sm:$0xff]
    %v80 = vld [vmem:[#allocation5 + $0x50] sm:$0xff]
    %v81 = vld [vmem:[#allocation5 + $0x58] sm:$0xff]
    %v82 = vld [vmem:[#allocation5 + $0x60] sm:$0xff]
    %v83 = vld [vmem:[#allocation5 + $0x68] sm:$0xff]
    %v84 = vld [vmem:[#allocation5 + $0x70] sm:$0xff]
    %v85 = vld [vmem:[#allocation5 + $0x78] sm:$0xff]
    %v86 = vld [vmem:[%s2] sm:$0x1]
    %v88 = vlaneseq
    %v89 = vshrl.u32 %v88, 7
    %v90 = vsub.s32 0, %v89
    %v91 = vrot.slane %v86, %v90
    %93 = vmatprep.subr.mxu0 0.0
    %94 = vmatpush1.msra.mxu0 %v85
    %95 = vmatprep.subr.mxu0 0.0
    %96 = vmatpush1.msra.mxu0 %v84
    %97 = vmatprep.subr.mxu0 0.0
    %98 = vmatpush1.msra.mxu0 %v83
    %99 = vmatprep.subr.mxu0 0.0
    %100 = vmatpush1.msra.mxu0 %v82
    %101 = vmatprep.subr.mxu0 0.0
    %102 = vmatpush1.msra.mxu0 %v81
    %103 = vmatprep.subr.mxu0 0.0
    %104 = vmatpush1.msra.mxu0 %v80
    %105 = vmatprep.subr.mxu0 0.0
    %106 = vmatpush1.msra.mxu0 %v79
    %107 = vmatprep.subr.mxu0 0.0
    %108 = vmatpush1.msra.mxu0 %v78
    %109 = vmatprep.subr.mxu0 0.0
    %110 = vmatpush1.msra.mxu0 %v77
    %111 = vmatprep.subr.mxu0 0.0
    %112 = vmatpush1.msra.mxu0 %v76
    %113 = vmatprep.subr.mxu0 0.0
    %114 = vmatpush1.msra.mxu0 %v75
    %115 = vmatprep.subr.mxu0 0.0
    %116 = vmatpush1.msra.mxu0 %v74
    %117 = vmatprep.subr.mxu0 0.0
    %118 = vmatpush1.msra.mxu0 %v73
    %119 = vmatprep.subr.mxu0 0.0
    %120 = vmatpush1.msra.mxu0 %v72
    %121 = vmatprep.subr.mxu0 0.0
    %122 = vmatpush1.msra.mxu0 %v71
    %123 = vmatprep.subr.mxu0 0.0
    %124 = vmatpush1.msra.mxu0 %v70
    %125 = vmatprep.subr.mxu0 0.0
    %126 = vmatpush2.msra.mxu0 0.0
    %127 = vmatprep.subr.mxu0 0.0
    %128 = vmatpush2.msra.mxu0 0.0
    %129 = vmatprep.subr.mxu0 0.0
    %130 = vmatpush2.msra.mxu0 0.0
    %131 = vmatprep.subr.mxu0 0.0
    %132 = vmatpush2.msra.mxu0 0.0
    %133 = vmatprep.subr.mxu0 0.0
    %134 = vmatpush2.msra.mxu0 0.0
    %135 = vmatprep.subr.mxu0 0.0
    %136 = vmatpush2.msra.mxu0 0.0
    %137 = vmatprep.subr.mxu0 0.0
    %138 = vmatpush2.msra.mxu0 0.0
    %139 = vmatprep.subr.mxu0 0.0
    %140 = vmatpush2.msra.mxu0 0.0
    %141 = vmatprep.subr.mxu0 0.0
    %142 = vmatpush2.msra.mxu0 0.0
    %143 = vmatprep.subr.mxu0 0.0
    %144 = vmatpush2.msra.mxu0 0.0
    %145 = vmatprep.subr.mxu0 0.0
    %146 = vmatpush2.msra.mxu0 0.0
    %147 = vmatprep.subr.mxu0 0.0
    %148 = vmatpush2.msra.mxu0 0.0
    %149 = vmatprep.subr.mxu0 0.0
    %150 = vmatpush2.msra.mxu0 0.0
    %151 = vmatprep.subr.mxu0 0.0
    %152 = vmatpush2.msra.mxu0 0.0
    %153 = vmatprep.subr.mxu0 0.0
    %154 = vmatpush2.msra.mxu0 0.0
    %155 = vmatprep.subr.mxu0 0.0
    %156 = vmatpush2.msra.mxu0 0.0
    %157 = vmatprep.mubr.f32.mxu0 0.0
    %158 = vmatmul.mubr.f32.gmra.mxu0 %v68
    %v159 = vpop.f32.mrf.mxu0
    %v160 = vadd.f32 %v91, %v159
    %v161 = vpop.f32.mrf.mxu0
    %162 = vmatprep.mubr.f32.mxu0 0.0
    %163 = vmatmul.mubr.f32.gmra.mxu0 %v69
    %v164 = vpop.f32.mrf.mxu0
    %v165 = vadd.f32 %v91, %v164
    %v166 = vpop.f32.mrf.mxu0
    %167 = vdwg.mxu0
    %v168 = vmax.f32 %v160, 0.0
    %v169 = vmax.f32 %v165, 0.0
    %v170 = vld [vmem:[#allocation7] sm:$0xff]
    %v171 = vld [vmem:[#allocation7 + $0x8] sm:$0xff]
    %v172 = vld [vmem:[#allocation7 + $0x10] sm:$0xff]
    %v173 = vld [vmem:[#allocation7 + $0x18] sm:$0xff]
    %v174 = vld [vmem:[#allocation7 + $0x20] sm:$0xff]
    %v175 = vld [vmem:[#allocation7 + $0x28] sm:$0xff]
    %v176 = vld [vmem:[#allocation7 + $0x30] sm:$0xff]
    %v177 = vld [vmem:[#allocation7 + $0x38] sm:$0xff]
    %v178 = vld [vmem:[#allocation7 + $0x40] sm:$0xff]
    %v179 = vld [vmem:[#allocation7 + $0x48] sm:$0xff]
    %v180 = vld [vmem:[#allocation7 + $0x50] sm:$0xff]
    %v181 = vld [vmem:[#allocation7 + $0x58] sm:$0xff]
    %v182 = vld [vmem:[#allocation7 + $0x60] sm:$0xff]
    %v183 = vld [vmem:[#allocation7 + $0x68] sm:$0xff]
    %v184 = vld [vmem:[#allocation7 + $0x70] sm:$0xff]
    %v185 = vld [vmem:[#allocation7 + $0x78] sm:$0xff]
    %v186 = vld [vmem:[%s4] sm:$0x1]
    %v188 = vlaneseq
    %v189 = vshrl.u32 %v188, 7
    %v190 = vsub.s32 0, %v189
    %v191 = vrot.slane %v186, %v190
    %193 = vmatprep.subr.mxu0 0.0
    %194 = vmatpush1.msra.mxu0 %v185
    %195 = vmatprep.subr.mxu0 0.0
    %196 = vmatpush1.msra.mxu0 %v184
    %197 = vmatprep.subr.mxu0 0.0
    %198 = vmatpush1.msra.mxu0 %v183
    %199 = vmatprep.subr.mxu0 0.0
    %200 = vmatpush1.msra.mxu0 %v182
    %201 = vmatprep.subr.mxu0 0.0
    %202 = vmatpush1.msra.mxu0 %v181
    %203 = vmatprep.subr.mxu0 0.0
    %204 = vmatpush1.msra.mxu0 %v180
    %205 = vmatprep.subr.mxu0 0.0
    %206 = vmatpush1.msra.mxu0 %v179
    %207 = vmatprep.subr.mxu0 0.0
    %208 = vmatpush1.msra.mxu0 %v178
    %209 = vmatprep.subr.mxu0 0.0
    %210 = vmatpush1.msra.mxu0 %v177
    %211 = vmatprep.subr.mxu0 0.0
    %212 = vmatpush1.msra.mxu0 %v176
    %213 = vmatprep.subr.mxu0 0.0
    %214 = vmatpush1.msra.mxu0 %v175
    %215 = vmatprep.subr.mxu0 0.0
    %216 = vmatpush1.msra.mxu0 %v174
    %217 = vmatprep.subr.mxu0 0.0
    %218 = vmatpush1.msra.mxu0 %v173
    %219 = vmatprep.subr.mxu0 0.0
    %220 = vmatpush1.msra.mxu0 %v172
    %221 = vmatprep.subr.mxu0 0.0
    %222 = vmatpush1.msra.mxu0 %v171
    %223 = vmatprep.subr.mxu0 0.0
    %224 = vmatpush1.msra.mxu0 %v170
    %225 = vmatprep.subr.mxu0 0.0
    %226 = vmatpush2.msra.mxu0 0.0
    %227 = vmatprep.subr.mxu0 0.0
    %228 = vmatpush2.msra.mxu0 0.0
    %229 = vmatprep.subr.mxu0 0.0
    %230 = vmatpush2.msra.mxu0 0.0
    %231 = vmatprep.subr.mxu0 0.0
    %232 = vmatpush2.msra.mxu0 0.0
    %233 = vmatprep.subr.mxu0 0.0
    %234 = vmatpush2.msra.mxu0 0.0
    %235 = vmatprep.subr.mxu0 0.0
    %236 = vmatpush2.msra.mxu0 0.0
    %237 = vmatprep.subr.mxu0 0.0
    %238 = vmatpush2.msra.mxu0 0.0
    %239 = vmatprep.subr.mxu0 0.0
    %240 = vmatpush2.msra.mxu0 0.0
    %241 = vmatprep.subr.mxu0 0.0
    %242 = vmatpush2.msra.mxu0 0.0
    %243 = vmatprep.subr.mxu0 0.0
    %244 = vmatpush2.msra.mxu0 0.0
    %245 = vmatprep.subr.mxu0 0.0
    %246 = vmatpush2.msra.mxu0 0.0
    %247 = vmatprep.subr.mxu0 0.0
    %248 = vmatpush2.msra.mxu0 0.0
    %249 = vmatprep.subr.mxu0 0.0
    %250 = vmatpush2.msra.mxu0 0.0
    %251 = vmatprep.subr.mxu0 0.0
    %252 = vmatpush2.msra.mxu0 0.0
    %253 = vmatprep.subr.mxu0 0.0
    %254 = vmatpush2.msra.mxu0 0.0
    %255 = vmatprep.subr.mxu0 0.0
    %256 = vmatpush2.msra.mxu0 0.0
    %257 = vmatprep.mubr.f32.mxu0 0.0
    %258 = vmatmul.mubr.f32.gmra.mxu0 %v168
    %v259 = vpop.f32.mrf.mxu0
    %v260 = vadd.f32 %v191, %v259
    %v261 = vpop.f32.mrf.mxu0
    %262 = vmatprep.mubr.f32.mxu0 0.0
    %263 = vmatmul.mubr.f32.gmra.mxu0 %v169
    %v264 = vpop.f32.mrf.mxu0
    %v265 = vadd.f32 %v191, %v264
    %v266 = vpop.f32.mrf.mxu0
    %267 = vdwg.mxu0
    %v268 = vld [vmem:[%s5] sm:$0x1]
    %v269 = vld [vmem:[%s6] sm:$0x1]
    %v270 = vadd.f32 %v260, %v68
    %v271 = vadd.f32 %v265, %v69
    %272 = vadd.xlane.f32.xlu0 %v270
    %v273 = vpop.xlane.xlu0 %272
    %274 = vadd.xlane.f32.xlu0 %v271
    %v275 = vpop.xlane.xlu0 %274
    %v276 = vmul.f32 %v273, 0.03125
    %v277 = vmul.f32 %v275, 0.03125
    %v278 = vsub.f32 %v270, %v276
    %v279 = vsub.f32 %v271, %v277
    %v280 = vlaneseq
    %v281 = vand.u32 %v280, 127
    %vm282 = vcmp.lt.s32.totalorder %v281, 32
    %v283 = vsel %vm282, 1, 0
    %vm284 = vcmp.eq.s32.totalorder %v283, 1
    %v285 = vsel %vm284, %v278, 0.0
    %v286 = vsel %vm284, %v279, 0.0
    %v287 = vmul.f32 %v285, %v285
    %v288 = vmul.f32 %v286, %v286
    %289 = vadd.xlane.f32.xlu0 %v287
    %v290 = vpop.xlane.xlu0 %289
    %291 = vadd.xlane.f32.xlu0 %v288
    %v292 = vpop.xlane.xlu0 %291
    %v293 = vmul.f32 %v290, 0.03125
    %v294 = vmul.f32 %v292, 0.03125
    %v295 = vadd.f32 %v293, 1e-05
    %v296 = vadd.f32 %v294, 1e-05
    %v297 = vrsqrt.pop %v295
    %v298 = vrsqrt.pop %v296
    %v299 = vmul.f32 %v285, %v297
    %v300 = vmul.f32 %v286, %v298
    %v302 = vlaneseq
    %v303 = vshrl.u32 %v302, 7
    %v304 = vsub.s32 0, %v303
    %v305 = vrot.slane %v268, %v304
    %v307 = vmul.f32 %v299, %v305
    %v308 = vmul.f32 %v300, %v305
    %v310 = vlaneseq
    %v311 = vshrl.u32 %v310, 7
    %v312 = vsub.s32 0, %v311
    %v313 = vrot.slane %v269, %v312
    %v315 = vadd.f32 %v307, %v313
    %v316 = vadd.f32 %v308, %v313
    %317 = vst [vmem:[#allocation8] sm:$0xff] %v315
    %318 = vst [vmem:[#allocation8 + $0x8] sm:$0xff] %v316
    // Predicated region
    $region42: #{tpu_custom_call.1} parent=1 // pred_check
      _
    $region43: #{tpu_custom_call.1} parent=1 // pred_check_branch
      %320 = sbr.rel (0) target = $region45
    $region44: #{tpu_custom_call.1} parent=1 // pred_region
      %s322 = ssub.s32 256, 256
      %323 = vsyncadd [#allocation4], %s322
      %s324 = sshll.u32 [#allocation8], 4
      %s325 = int_to_ptr.vmem [resolvable:$true] %s324
      %330 = dma.vmem_to_hbm [thread:$0]  %s325, 256, %s7, [#allocation4], 128, 128, 8
    $region45: #{tpu_custom_call.1} parent=1 // pred_fallthru
      _
    // Predicated region
    $region46: #{tpu_custom_call.1} parent=1 // pred_check
      _
    $region47: #{tpu_custom_call.1} parent=1 // pred_check_branch
      %332 = sbr.rel (0) target = $region49
    $region48: #{tpu_custom_call.1} parent=1 // pred_region
      %333 = dma.done [#allocation4], 256
    $region49: #{tpu_custom_call.1} parent=1 // pred_fallthru
      _
    %334 = vsyncpa [#allocation3], 1
    %335 = vsyncpa [#allocation6], 1
    %336 = vsyncpa [#allocation4], 1

</llo_original>
